<compile_context>
chip_gen: v7x
topology: tpu7x:2x2x1
jax: 0.10.0
libtpu: 0.0.40
codegen_flags: <defaults>
</compile_context>

<pallas_src>
import functools

import jax
import jax.numpy as jnp
from jax.experimental import pallas as pl
from jax.experimental.pallas import tpu as pltpu


def _round_up(x, m):
    return ((x + m - 1) // m) * m


def actor_kernel(x_ref, act_ref, w1_ref, w2_ref, b2_ref, w3_ref, b3_ref,
                 out_ref, *, phi, max_action):
    # x_ref  : [TB, IN_P] f32, packed [state | action | 1.0 bias lane | 0...]
    # act_ref: [TB, action_dim] f32 (narrow, for the residual add only)
    # w1_ref : bf16 [IN_P, H1_P] (b1 folded in as the bias-lane row)
    # w2_ref : bf16 [H1_P, H2_P], b2_ref: f32 [1, H2_P]
    # w3_ref : bf16 [H2_P, action_dim], b3_ref: f32 [1, action_dim]
    act = act_ref[...]

    # l1 (+ folded bias) + relu -- single MXU pass over the packed input.
    h1 = jnp.dot(x_ref[...].astype(jnp.bfloat16), w1_ref[...],
                 preferred_element_type=jnp.float32)
    h1 = jnp.maximum(h1, 0.0)

    # l2 + relu
    h2 = jnp.dot(h1.astype(jnp.bfloat16), w2_ref[...],
                 preferred_element_type=jnp.float32) + b2_ref[...]
    h2 = jnp.maximum(h2, 0.0)

    # l3 -> scaled tanh perturbation (f32 on the EUP), narrow N = action_dim
    a = jnp.dot(h2.astype(jnp.bfloat16), w3_ref[...],
                preferred_element_type=jnp.float32) + b3_ref[...]
    a = phi * max_action * jnp.tanh(a)

    # residual add + clamp; store narrow (action_dim lanes) output
    out_ref[...] = jnp.clip(a + act, -max_action, max_action).astype(out_ref.dtype)


def prepare_params(params, state_dim, action_dim):
    """Pack/pad weights: combined w1 with folded b1, bf16 weights, f32 biases."""
    w1, b1, w2, b2, w3, b3 = params
    hid1, hid2 = w1.shape[1], w2.shape[1]
    in_dim = state_dim + action_dim
    in_pad = _round_up(in_dim + 1, 128)   # +1 bias lane: 24 -> 128
    h1_p = _round_up(hid1, 128)           # 400 -> 512
    h2_p = _round_up(hid2, 128)           # 300 -> 384

    def pad2(x, shape, dtype):
        buf = jnp.zeros(shape, dtype)
        return buf.at[:x.shape[0], :x.shape[1]].set(x.astype(dtype))

    # Combined l1 weight; b1 lives in the bias-lane row (input lane = 1.0).
    w1_packed = jnp.zeros((in_pad, h1_p), jnp.bfloat16)
    w1_packed = w1_packed.at[:in_dim, :hid1].set(w1.astype(jnp.bfloat16))
    w1_packed = w1_packed.at[in_dim, :hid1].set(b1[0].astype(jnp.bfloat16))

    return dict(
        w1=w1_packed,
        w2=pad2(w2, (h1_p, h2_p), jnp.bfloat16),
        b2=pad2(b2, (1, h2_p), jnp.float32),
        w3=pad2(w3, (h2_p, action_dim), jnp.bfloat16),   # narrow N, no col pad
        b3=b3.astype(jnp.float32),                       # (1, action_dim)
        state_dim=state_dim, action_dim=action_dim, in_pad=in_pad,
    )


def actor_forward(state, action, prepped, *, phi, max_action, tile_b=1024):
    """Pallas implementation of Actor.forward(state, action)."""
    B = state.shape[0]
    state_dim = prepped["state_dim"]
    action_dim = prepped["action_dim"]
    in_pad = prepped["in_pad"]
    bias_col = state_dim + action_dim

    # Balanced batch tiles; ensure >= 2 grid steps when B > 8 so v7x's two
    # TensorCores both get work (harmless elsewhere).
    if B > 8:
        tile_b = min(tile_b, _round_up(pl.cdiv(B, 2), 8))
    num_tiles = pl.cdiv(B, tile_b)
    tb = _round_up(pl.cdiv(B, num_tiles), 8)
    b_pad = tb * num_tiles

    # Packed lane-dense input: [state | action | 1.0 (bias lane) | zeros].
    x_p = jnp.zeros((b_pad, in_pad), jnp.float32)
    x_p = x_p.at[:B, :state_dim].set(state)
    x_p = x_p.at[:B, state_dim:bias_col].set(action)
    x_p = x_p.at[:, bias_col].set(1.0)

    # Narrow action stream only for the residual add (padding rows are zero;
    # padded output rows are sliced off below).
    act_p = jnp.zeros((b_pad, action_dim), jnp.float32).at[:B].set(action)

    w1, w2, b2, w3, b3 = (prepped[k] for k in ("w1", "w2", "b2", "w3", "b3"))

    kernel = functools.partial(actor_kernel, phi=phi, max_action=max_action)

    def stream_spec(feat):
        return pl.BlockSpec((tb, feat), lambda i: (i, 0))

    def const_spec(shape):
        return pl.BlockSpec(shape, lambda i: (0,) * len(shape))

    out = pl.pallas_call(
        kernel,
        grid=(num_tiles,),
        in_specs=[
            stream_spec(in_pad),                    # packed state|action|bias
            stream_spec(action_dim),                # narrow residual action
            const_spec(w1.shape),
            const_spec(w2.shape), const_spec(b2.shape),
            const_spec(w3.shape), const_spec(b3.shape),
        ],
        out_specs=stream_spec(action_dim),          # narrow output
        out_shape=jax.ShapeDtypeStruct((b_pad, action_dim), jnp.float32),
        compiler_params=pltpu.CompilerParams(
            dimension_semantics=("parallel",)),
    )(x_p, act_p, w1, w2, b2, w3, b3)

    return out[:B]


def init_actor_params(key, state_dim, action_dim):
    """Deterministic init matching PyTorch nn.Linear default (uniform +-1/sqrt(fan_in)).

    Weights returned already transposed to [in, out]; biases as [1, out]."""
    dims = [(state_dim + action_dim, 400), (400, 300), (300, action_dim)]
    params = []
    for (fan_in, fan_out) in dims:
        key, kw, kb = jax.random.split(key, 3)
        bound = 1.0 / jnp.sqrt(jnp.float32(fan_in))
        w = jax.random.uniform(kw, (fan_in, fan_out), jnp.float32, -bound, bound)
        b = jax.random.uniform(kb, (1, fan_out), jnp.float32, -bound, bound)
        params.extend([w, b])
    return tuple(params)


def actor_reference(state, action, params, *, phi, max_action):
    """Pure-JAX f32 reference for correctness checking."""
    w1, b1, w2, b2, w3, b3 = params
    xa = jnp.concatenate([state, action], axis=1)
    h1 = jnp.maximum(xa @ w1 + b1, 0.0)
    h2 = jnp.maximum(h1 @ w2 + b2, 0.0)
    a = phi * max_action * jnp.tanh(h2 @ w3 + b3)
    return jnp.clip(a + action, -max_action, max_action)


if __name__ == "__main__":
    state_dim = 17
    action_dim = 6
    batch = 2
    max_action = 1.0
    phi = 0.05

    key = jax.random.PRNGKey(0)
    kp, ks, ka = jax.random.split(key, 3)
    params = init_actor_params(kp, state_dim, action_dim)
    state = jax.random.normal(ks, (batch, state_dim), jnp.float32)
    action = jax.random.uniform(ka, (batch, action_dim), jnp.float32, -1.0, 1.0)

    prepped = prepare_params(params, state_dim, action_dim)
    out = actor_forward(state, action, prepped, phi=phi, max_action=max_action)
    out = jax.block_until_ready(out)

    ref = actor_reference(state, action, params, phi=phi, max_action=max_action)
    assert out.shape == (batch, action_dim)
    # bf16 MXU operands / folded bf16 b1 (f32 accumulate) -> relaxed tolerance
    # vs. the f32 reference; the phi*max_action=0.05 output scaling keeps the
    # absolute error well inside this.
    assert jnp.allclose(out, ref, atol=5e-3, rtol=5e-3), "mismatch vs reference"

    print("KERNEL_OK")
</pallas_src>

<mosaic_0001>
module attributes {stable_mosaic.version = 11 : i64} {
  func.func @actor_kernel(%arg0: i32, %arg1: memref<8x128xf32, #tpu.memory_space<vmem>>, %arg2: memref<8x6xf32, #tpu.memory_space<vmem>>, %arg3: memref<128x512xbf16, #tpu.memory_space<vmem>>, %arg4: memref<512x384xbf16, #tpu.memory_space<vmem>>, %arg5: memref<1x384xf32, #tpu.memory_space<vmem>>, %arg6: memref<384x6xbf16, #tpu.memory_space<vmem>>, %arg7: memref<1x6xf32, #tpu.memory_space<vmem>>, %arg8: memref<8x6xf32, #tpu.memory_space<vmem>>) attributes {dimension_semantics = [#tpu.dimension_semantics<parallel>], iteration_bounds = array<i64: 1>, scalar_prefetch = 0 : i64, scratch_operands = 0 : i64, tpu.core_type = #tpu.core_type<tc>, window_params = [{transform_indices = @transform_0, window_bounds = array<i64: 8, 128>}, {transform_indices = @transform_1, window_bounds = array<i64: 8, 6>}, {pipeline_mode = #tpu.pipeline_mode<synchronous>, transform_indices = @transform_2, window_bounds = array<i64: 128, 512>}, {pipeline_mode = #tpu.pipeline_mode<synchronous>, transform_indices = @transform_3, window_bounds = array<i64: 512, 384>}, {pipeline_mode = #tpu.pipeline_mode<synchronous>, transform_indices = @transform_4, window_bounds = array<i64: 1, 384>}, {pipeline_mode = #tpu.pipeline_mode<synchronous>, transform_indices = @transform_5, window_bounds = array<i64: 384, 6>}, {pipeline_mode = #tpu.pipeline_mode<synchronous>, transform_indices = @transform_6, window_bounds = array<i64: 1, 6>}, {transform_indices = @transform_7, window_bounds = array<i64: 8, 6>}]} {
    %c0 = arith.constant 0 : index
    %c0_0 = arith.constant 0 : index
    %0 = vector.load %arg2[%c0, %c0_0] : memref<8x6xf32, #tpu.memory_space<vmem>>, vector<8x6xf32>
    %c0_1 = arith.constant 0 : index
    %c0_2 = arith.constant 0 : index
    %1 = vector.load %arg1[%c0_1, %c0_2] : memref<8x128xf32, #tpu.memory_space<vmem>>, vector<8x128xf32>
    %2 = arith.truncf %1 : vector<8x128xf32> to vector<8x128xbf16>
    %c0_3 = arith.constant 0 : index
    %c0_4 = arith.constant 0 : index
    %3 = vector.load %arg3[%c0_3, %c0_4] : memref<128x512xbf16, #tpu.memory_space<vmem>>, vector<128x512xbf16>
    %cst = arith.constant dense<0.000000e+00> : vector<8x512xf32>
    %4 = tpu.matmul %2, %3, %cst {dimension_numbers = #tpu.dot_dimension_numbers<[1], [0], [0], [1], [0, 0, 1, 1], [], []>} : vector<8x128xbf16>, vector<128x512xbf16>, vector<8x512xf32> -> vector<8x512xf32>
    %cst_5 = arith.constant 0.000000e+00 : f32
    %5 = vector.broadcast %cst_5 : f32 to vector<8x512xf32>
    %6 = arith.maximumf %4, %5 : vector<8x512xf32>
    %7 = arith.truncf %6 : vector<8x512xf32> to vector<8x512xbf16>
    %c0_6 = arith.constant 0 : index
    %c0_7 = arith.constant 0 : index
    %8 = vector.load %arg4[%c0_6, %c0_7] : memref<512x384xbf16, #tpu.memory_space<vmem>>, vector<512x384xbf16>
    %cst_8 = arith.constant dense<0.000000e+00> : vector<8x384xf32>
    %9 = tpu.matmul %7, %8, %cst_8 {dimension_numbers = #tpu.dot_dimension_numbers<[1], [0], [0], [1], [0, 0, 1, 1], [], []>} : vector<8x512xbf16>, vector<512x384xbf16>, vector<8x384xf32> -> vector<8x384xf32>
    %c0_9 = arith.constant 0 : index
    %c0_10 = arith.constant 0 : index
    %10 = vector.load %arg5[%c0_9, %c0_10] : memref<1x384xf32, #tpu.memory_space<vmem>>, vector<1x384xf32>
    %11 = vector.broadcast %10 : vector<1x384xf32> to vector<8x384xf32>
    %12 = arith.addf %9, %11 : vector<8x384xf32>
    %cst_11 = arith.constant 0.000000e+00 : f32
    %13 = vector.broadcast %cst_11 : f32 to vector<8x384xf32>
    %14 = arith.maximumf %12, %13 : vector<8x384xf32>
    %15 = arith.truncf %14 : vector<8x384xf32> to vector<8x384xbf16>
    %c0_12 = arith.constant 0 : index
    %c0_13 = arith.constant 0 : index
    %16 = vector.load %arg6[%c0_12, %c0_13] : memref<384x6xbf16, #tpu.memory_space<vmem>>, vector<384x6xbf16>
    %cst_14 = arith.constant dense<0.000000e+00> : vector<8x6xf32>
    %17 = tpu.matmul %15, %16, %cst_14 {dimension_numbers = #tpu.dot_dimension_numbers<[1], [0], [0], [1], [0, 0, 1, 1], [], []>} : vector<8x384xbf16>, vector<384x6xbf16>, vector<8x6xf32> -> vector<8x6xf32>
    %c0_15 = arith.constant 0 : index
    %c0_16 = arith.constant 0 : index
    %18 = vector.load %arg7[%c0_15, %c0_16] : memref<1x6xf32, #tpu.memory_space<vmem>>, vector<1x6xf32>
    %19 = vector.broadcast %18 : vector<1x6xf32> to vector<8x6xf32>
    %20 = arith.addf %17, %19 : vector<8x6xf32>
    %21 = math.tanh %20 : vector<8x6xf32>
    %cst_17 = arith.constant 5.000000e-02 : f32
    %22 = vector.broadcast %cst_17 : f32 to vector<8x6xf32>
    %23 = arith.mulf %22, %21 : vector<8x6xf32>
    %24 = arith.addf %23, %0 : vector<8x6xf32>
    %cst_18 = arith.constant -1.000000e+00 : f32
    %cst_19 = arith.constant 1.000000e+00 : f32
    %25 = vector.broadcast %cst_18 : f32 to vector<8x6xf32>
    %26 = arith.maximumf %25, %24 : vector<8x6xf32>
    %27 = vector.broadcast %cst_19 : f32 to vector<8x6xf32>
    %28 = arith.minimumf %27, %26 : vector<8x6xf32>
    %c0_20 = arith.constant 0 : index
    %c0_21 = arith.constant 0 : index
    %29 = vector.load %arg8[%c0_20, %c0_21] : memref<8x6xf32, #tpu.memory_space<vmem>>, vector<8x6xf32>
    tpu.vector_store %arg8[%c0_20, %c0_21], %28 {strides = array<i32>} : memref<8x6xf32, #tpu.memory_space<vmem>>, vector<8x6xf32>,
    return
  }
  func.func @transform_0(%arg0: i32) -> (i32, i32) {
    %c0_i32 = arith.constant 0 : i32
    %c0_i32_0 = arith.constant 0 : i32
    return %arg0, %c0_i32 : i32, i32
  }
  func.func @transform_1(%arg0: i32) -> (i32, i32) {
    %c0_i32 = arith.constant 0 : i32
    %c0_i32_0 = arith.constant 0 : i32
    return %arg0, %c0_i32 : i32, i32
  }
  func.func @transform_2(%arg0: i32) -> (i32, i32) {
    %c0_i32 = arith.constant 0 : i32
    %c0_i32_0 = arith.constant 0 : i32
    %c0_i32_1 = arith.constant 0 : i32
    return %c0_i32, %c0_i32_0 : i32, i32
  }
  func.func @transform_3(%arg0: i32) -> (i32, i32) {
    %c0_i32 = arith.constant 0 : i32
    %c0_i32_0 = arith.constant 0 : i32
    %c0_i32_1 = arith.constant 0 : i32
    return %c0_i32, %c0_i32_0 : i32, i32
  }
  func.func @transform_4(%arg0: i32) -> (i32, i32) {
    %c0_i32 = arith.constant 0 : i32
    %c0_i32_0 = arith.constant 0 : i32
    %c0_i32_1 = arith.constant 0 : i32
    return %c0_i32, %c0_i32_0 : i32, i32
  }
  func.func @transform_5(%arg0: i32) -> (i32, i32) {
    %c0_i32 = arith.constant 0 : i32
    %c0_i32_0 = arith.constant 0 : i32
    %c0_i32_1 = arith.constant 0 : i32
    return %c0_i32, %c0_i32_0 : i32, i32
  }
  func.func @transform_6(%arg0: i32) -> (i32, i32) {
    %c0_i32 = arith.constant 0 : i32
    %c0_i32_0 = arith.constant 0 : i32
    %c0_i32_1 = arith.constant 0 : i32
    return %c0_i32, %c0_i32_0 : i32, i32
  }
  func.func @transform_7(%arg0: i32) -> (i32, i32) {
    %c0_i32 = arith.constant 0 : i32
    %c0_i32_0 = arith.constant 0 : i32
    return %arg0, %c0_i32 : i32, i32
  }
}

</mosaic_0001>

<llo_original>
// kernel: tpu_custom_call.1
$region0: #{tpu_custom_call.1}
  #allocation0 [shape = 'u32[]', space=smem, size = 0x4, offset = 0x4, fixed_abs, tag = 'smem constant byte address 0x4 - core index']
  #allocation1 [shape = 'u32[144,128]{1,0:T(1,128)}', space=vmem, size = 0x12000, scoped, tag = 'internal scratch']
  %s0 = inlined_call_operand.vmem [shape: f32[8,128], index: 0, kind: input, shape index: {}]
  %s1 = inlined_call_operand.vmem [shape: f32[8,6], index: 1, kind: input, shape index: {}]
  %s2 = inlined_call_operand.hbm [shape: bf16[128,512], index: 2, kind: input, shape index: {}]
  %s3 = inlined_call_operand.hbm [shape: bf16[512,384], index: 3, kind: input, shape index: {}]
  %s4 = inlined_call_operand.vmem [shape: f32[1,384], index: 4, kind: input, shape index: {}]
  %s5 = inlined_call_operand.vmem [shape: bf16[384,6], index: 5, kind: input, shape index: {}]
  %s6 = inlined_call_operand.vmem [shape: f32[1,6], index: 6, kind: input, shape index: {}]
  %s7 = inlined_call_operand.hbm [shape: f32[8,6], index: 7, kind: output, shape index: {}]
  %s8 = sld [smem:[#allocation0]]
  $region46: #{tpu_custom_call.1} parent=0
    _
  %s10 = ssub.s32 1, %s8
  %s11 = scalar_select 0, %s10, %s8
  $region1: #{tpu_custom_call.1} parent=0
    #allocation2 [shape = 'u8[131072]{0}', space=vmem, size = 0x20000, scoped, tag = 'input window, operand 2, single buffered']
    #allocation3 [shape = 's32[1]{0}', space=sflag, size = 0x4, scoped, tag = 'scoped memory for tpu_custom_call.1']
    #allocation4 [shape = 's32[1]{0}', space=sflag, size = 0x4, scoped, tag = 'scoped memory for tpu_custom_call.1']
    #allocation5 [shape = 'u8[393216]{0}', space=vmem, size = 0x60000, scoped, tag = 'input window, operand 3, single buffered']
    #allocation6 [shape = 's32[1]{0}', space=sflag, size = 0x4, scoped, tag = 'scoped memory for tpu_custom_call.1']
    #allocation7 [shape = 'u8[4096]{0}', space=vmem, size = 0x1000, scoped, tag = 'output window, operand 0, single buffered']
    %12 = vsyncpa [#allocation3], 0
    %13 = vsyncpa [#allocation6], 0
    %14 = vsyncpa [#allocation4], 0
    // Predicated region
    $region2: #{tpu_custom_call.1} parent=1 // pred_check
      _
    $region3: #{tpu_custom_call.1} parent=1 // pred_check_branch
      %16 = sbr.rel (0) target = $region5
    $region4: #{tpu_custom_call.1} parent=1 // pred_region
      _
    $region5: #{tpu_custom_call.1} parent=1 // pred_fallthru
      _
    // Predicated region
    $region6: #{tpu_custom_call.1} parent=1 // pred_check
      _
    $region7: #{tpu_custom_call.1} parent=1 // pred_check_branch
      %18 = sbr.rel (0) target = $region9
    $region8: #{tpu_custom_call.1} parent=1 // pred_region
      _
    $region9: #{tpu_custom_call.1} parent=1 // pred_fallthru
      _
    // Predicated region
    $region10: #{tpu_custom_call.1} parent=1 // pred_check
      _
    $region11: #{tpu_custom_call.1} parent=1 // pred_check_branch
      %20 = sbr.rel (0) target = $region13
    $region12: #{tpu_custom_call.1} parent=1 // pred_region
      %s22 = ssub.s32 4096, 4096
      %23 = vsyncadd [#allocation3], %s22
      %s24 = sshll.u32 [#allocation2], 4
      %s25 = int_to_ptr.vmem [resolvable:$true] %s24
      %30 = dma.hbm_to_vmem [thread:$0]  %s2, 4096, %s25, [#allocation3], 256, 256, 16
    $region13: #{tpu_custom_call.1} parent=1 // pred_fallthru
      _
    // Predicated region
    $region14: #{tpu_custom_call.1} parent=1 // pred_check
      _
    $region15: #{tpu_custom_call.1} parent=1 // pred_check_branch
      %32 = sbr.rel (0) target = $region17
    $region16: #{tpu_custom_call.1} parent=1 // pred_region
      %s34 = ssub.s32 12288, 12288
      %35 = vsyncadd [#allocation6], %s34
      %s36 = sshll.u32 [#allocation5], 4
      %s37 = int_to_ptr.vmem [resolvable:$true] %s36
      %42 = dma.hbm_to_vmem [thread:$0]  %s3, 12288, %s37, [#allocation6], 192, 192, 12
    $region17: #{tpu_custom_call.1} parent=1 // pred_fallthru
      _
    // Predicated region
    $region18: #{tpu_custom_call.1} parent=1 // pred_check
      _
    $region19: #{tpu_custom_call.1} parent=1 // pred_check_branch
      %44 = sbr.rel (0) target = $region21
    $region20: #{tpu_custom_call.1} parent=1 // pred_region
      _
    $region21: #{tpu_custom_call.1} parent=1 // pred_fallthru
      _
    // Predicated region
    $region22: #{tpu_custom_call.1} parent=1 // pred_check
      _
    $region23: #{tpu_custom_call.1} parent=1 // pred_check_branch
      %46 = sbr.rel (0) target = $region25
    $region24: #{tpu_custom_call.1} parent=1 // pred_region
      _
    $region25: #{tpu_custom_call.1} parent=1 // pred_fallthru
      _
    // Predicated region
    $region26: #{tpu_custom_call.1} parent=1 // pred_check
      _
    $region27: #{tpu_custom_call.1} parent=1 // pred_check_branch
      %48 = sbr.rel (0) target = $region29
    $region28: #{tpu_custom_call.1} parent=1 // pred_region
      _
    $region29: #{tpu_custom_call.1} parent=1 // pred_fallthru
      _
    // Predicated region
    $region30: #{tpu_custom_call.1} parent=1 // pred_check
      _
    $region31: #{tpu_custom_call.1} parent=1 // pred_check_branch
      %50 = sbr.rel (0) target = $region33
    $region32: #{tpu_custom_call.1} parent=1 // pred_region
      %51 = dma.done [#allocation3], 4096
    $region33: #{tpu_custom_call.1} parent=1 // pred_fallthru
      _
    // Predicated region
    $region34: #{tpu_custom_call.1} parent=1 // pred_check
      _
    $region35: #{tpu_custom_call.1} parent=1 // pred_check_branch
      %53 = sbr.rel (0) target = $region37
    $region36: #{tpu_custom_call.1} parent=1 // pred_region
      %54 = dma.done [#allocation6], 12288
    $region37: #{tpu_custom_call.1} parent=1 // pred_fallthru
      _
    %v56 = vld [vmem:[%s1] sm:$0xff]
    %v57 = vld [vmem:[%s0] sm:$0xff]
    %v58 = vpack.c.bf16 %v57, %v57
    %v59 = vld [vmem:[#allocation2] sm:$0xff]
    %v60 = vld [vmem:[#allocation2 + $0x8] sm:$0xff]
    %v61 = vld [vmem:[#allocation2 + $0x10] sm:$0xff]
    %v62 = vld [vmem:[#allocation2 + $0x18] sm:$0xff]
    %v63 = vld [vmem:[#allocation2 + $0x20] sm:$0xff]
    %v64 = vld [vmem:[#allocation2 + $0x28] sm:$0xff]
    %v65 = vld [vmem:[#allocation2 + $0x30] sm:$0xff]
    %v66 = vld [vmem:[#allocation2 + $0x38] sm:$0xff]
    %v67 = vld [vmem:[#allocation2 + $0x40] sm:$0xff]
    %v68 = vld [vmem:[#allocation2 + $0x48] sm:$0xff]
    %v69 = vld [vmem:[#allocation2 + $0x50] sm:$0xff]
    %v70 = vld [vmem:[#allocation2 + $0x58] sm:$0xff]
    %v71 = vld [vmem:[#allocation2 + $0x60] sm:$0xff]
    %v72 = vld [vmem:[#allocation2 + $0x68] sm:$0xff]
    %v73 = vld [vmem:[#allocation2 + $0x70] sm:$0xff]
    %v74 = vld [vmem:[#allocation2 + $0x78] sm:$0xff]
    %v75 = vld [vmem:[#allocation2 + $0x80] sm:$0xff]
    %v76 = vld [vmem:[#allocation2 + $0x88] sm:$0xff]
    %v77 = vld [vmem:[#allocation2 + $0x90] sm:$0xff]
    %v78 = vld [vmem:[#allocation2 + $0x98] sm:$0xff]
    %v79 = vld [vmem:[#allocation2 + $0xa0] sm:$0xff]
    %v80 = vld [vmem:[#allocation2 + $0xa8] sm:$0xff]
    %v81 = vld [vmem:[#allocation2 + $0xb0] sm:$0xff]
    %v82 = vld [vmem:[#allocation2 + $0xb8] sm:$0xff]
    %v83 = vld [vmem:[#allocation2 + $0xc0] sm:$0xff]
    %v84 = vld [vmem:[#allocation2 + $0xc8] sm:$0xff]
    %v85 = vld [vmem:[#allocation2 + $0xd0] sm:$0xff]
    %v86 = vld [vmem:[#allocation2 + $0xd8] sm:$0xff]
    %v87 = vld [vmem:[#allocation2 + $0xe0] sm:$0xff]
    %v88 = vld [vmem:[#allocation2 + $0xe8] sm:$0xff]
    %v89 = vld [vmem:[#allocation2 + $0xf0] sm:$0xff]
    %v90 = vld [vmem:[#allocation2 + $0xf8] sm:$0xff]
    %v123 = vunpack.c.l.b16 %v59
    %v124 = vunpack.c.h.b16 %v59
    %v125 = vunpack.c.l.b16 %v60
    %v126 = vunpack.c.h.b16 %v60
    %v127 = vunpack.c.l.b16 %v61
    %v128 = vunpack.c.h.b16 %v61
    %v129 = vunpack.c.l.b16 %v62
    %v130 = vunpack.c.h.b16 %v62
    %v131 = vunpack.c.l.b16 %v63
    %v132 = vunpack.c.h.b16 %v63
    %v133 = vunpack.c.l.b16 %v64
    %v134 = vunpack.c.h.b16 %v64
    %v135 = vunpack.c.l.b16 %v65
    %v136 = vunpack.c.h.b16 %v65
    %v137 = vunpack.c.l.b16 %v66
    %v138 = vunpack.c.h.b16 %v66
    %v139 = vunpack.c.l.b16 %v67
    %v140 = vunpack.c.h.b16 %v67
    %v141 = vunpack.c.l.b16 %v68
    %v142 = vunpack.c.h.b16 %v68
    %v143 = vunpack.c.l.b16 %v69
    %v144 = vunpack.c.h.b16 %v69
    %v145 = vunpack.c.l.b16 %v70
    %v146 = vunpack.c.h.b16 %v70
    %v147 = vunpack.c.l.b16 %v71
    %v148 = vunpack.c.h.b16 %v71
    %v149 = vunpack.c.l.b16 %v72
    %v150 = vunpack.c.h.b16 %v72
    %v151 = vunpack.c.l.b16 %v73
    %v152 = vunpack.c.h.b16 %v73
    %v153 = vunpack.c.l.b16 %v74
    %v154 = vunpack.c.h.b16 %v74
    %v155 = vunpack.c.l.b16 %v75
    %v156 = vunpack.c.h.b16 %v75
    %v157 = vunpack.c.l.b16 %v76
    %v158 = vunpack.c.h.b16 %v76
    %v159 = vunpack.c.l.b16 %v77
    %v160 = vunpack.c.h.b16 %v77
    %v161 = vunpack.c.l.b16 %v78
    %v162 = vunpack.c.h.b16 %v78
    %v163 = vunpack.c.l.b16 %v79
    %v164 = vunpack.c.h.b16 %v79
    %v165 = vunpack.c.l.b16 %v80
    %v166 = vunpack.c.h.b16 %v80
    %v167 = vunpack.c.l.b16 %v81
    %v168 = vunpack.c.h.b16 %v81
    %v169 = vunpack.c.l.b16 %v82
    %v170 = vunpack.c.h.b16 %v82
    %v171 = vunpack.c.l.b16 %v83
    %v172 = vunpack.c.h.b16 %v83
    %v173 = vunpack.c.l.b16 %v84
    %v174 = vunpack.c.h.b16 %v84
    %v175 = vunpack.c.l.b16 %v85
    %v176 = vunpack.c.h.b16 %v85
    %v177 = vunpack.c.l.b16 %v86
    %v178 = vunpack.c.h.b16 %v86
    %v179 = vunpack.c.l.b16 %v87
    %v180 = vunpack.c.h.b16 %v87
    %v181 = vunpack.c.l.b16 %v88
    %v182 = vunpack.c.h.b16 %v88
    %v183 = vunpack.c.l.b16 %v89
    %v184 = vunpack.c.h.b16 %v89
    %v185 = vunpack.c.l.b16 %v90
    %v186 = vunpack.c.h.b16 %v90
    %v187 = vpack.c.b16 %v127, %v123
    %v188 = vpack.c.b16 %v128, %v124
    %v189 = vpack.c.b16 %v129, %v125
    %v190 = vpack.c.b16 %v130, %v126
    %v191 = vpack.c.b16 %v135, %v131
    %v192 = vpack.c.b16 %v136, %v132
    %v193 = vpack.c.b16 %v137, %v133
    %v194 = vpack.c.b16 %v138, %v134
    %v195 = vpack.c.b16 %v143, %v139
    %v196 = vpack.c.b16 %v144, %v140
    %v197 = vpack.c.b16 %v145, %v141
    %v198 = vpack.c.b16 %v146, %v142
    %v199 = vpack.c.b16 %v151, %v147
    %v200 = vpack.c.b16 %v152, %v148
    %v201 = vpack.c.b16 %v153, %v149
    %v202 = vpack.c.b16 %v154, %v150
    %v203 = vpack.c.b16 %v159, %v155
    %v204 = vpack.c.b16 %v160, %v156
    %v205 = vpack.c.b16 %v161, %v157
    %v206 = vpack.c.b16 %v162, %v158
    %v207 = vpack.c.b16 %v167, %v163
    %v208 = vpack.c.b16 %v168, %v164
    %v209 = vpack.c.b16 %v169, %v165
    %v210 = vpack.c.b16 %v170, %v166
    %v211 = vpack.c.b16 %v175, %v171
    %v212 = vpack.c.b16 %v176, %v172
    %v213 = vpack.c.b16 %v177, %v173
    %v214 = vpack.c.b16 %v178, %v174
    %v215 = vpack.c.b16 %v183, %v179
    %v216 = vpack.c.b16 %v184, %v180
    %v217 = vpack.c.b16 %v185, %v181
    %v218 = vpack.c.b16 %v186, %v182
    %251 = vmatprep.subr.bf16.mxu0 %v188
    %252 = vmatpush1.bf16.msra.mxu0 %v187
    %253 = vmatprep.subr.bf16.mxu0 %v192
    %254 = vmatpush1.bf16.msra.mxu0 %v191
    %255 = vmatprep.subr.bf16.mxu0 %v196
    %256 = vmatpush1.bf16.msra.mxu0 %v195
    %257 = vmatprep.subr.bf16.mxu0 %v200
    %258 = vmatpush1.bf16.msra.mxu0 %v199
    %259 = vmatprep.subr.bf16.mxu0 %v204
    %260 = vmatpush1.bf16.msra.mxu0 %v203
    %261 = vmatprep.subr.bf16.mxu0 %v208
    %262 = vmatpush1.bf16.msra.mxu0 %v207
    %263 = vmatprep.subr.bf16.mxu0 %v212
    %264 = vmatpush1.bf16.msra.mxu0 %v211
    %265 = vmatprep.subr.bf16.mxu0 %v216
    %266 = vmatpush1.bf16.msra.mxu0 %v215
    %267 = vmatprep.subr.bf16.mxu0 0
    %268 = vmatpush1.bf16.msra.mxu0 0
    %269 = vmatprep.subr.bf16.mxu0 0
    %270 = vmatpush1.bf16.msra.mxu0 0
    %271 = vmatprep.subr.bf16.mxu0 0
    %272 = vmatpush1.bf16.msra.mxu0 0
    %273 = vmatprep.subr.bf16.mxu0 0
    %274 = vmatpush1.bf16.msra.mxu0 0
    %275 = vmatprep.subr.bf16.mxu0 0
    %276 = vmatpush1.bf16.msra.mxu0 0
    %277 = vmatprep.subr.bf16.mxu0 0
    %278 = vmatpush1.bf16.msra.mxu0 0
    %279 = vmatprep.subr.bf16.mxu0 0
    %280 = vmatpush1.bf16.msra.mxu0 0
    %281 = vmatprep.subr.bf16.mxu0 0
    %282 = vmatpush1.bf16.msra.mxu0 0
    %283 = vmatprep.mubr.bf16.mxu0 0
    %284 = vmatmul.mubr.bf16.gmra.mrb[0].mxu0 %v58
    %v285 = vpop.f32.mrb[0].mxu0
    %v286 = vadd.f32 0.0, %v285
    %v287 = vpop.f32.mrb[0].mxu0
    %v288 = vadd.f32 0.0, %v287
    %v289 = vpop.f32.mrb[0].mxu0
    %v290 = vpop.f32.mrb[0].mxu0
    %291 = vdwg.mxu0
    %292 = vmatprep.subr.bf16.mxu0 %v190
    %293 = vmatpush1.bf16.msra.mxu0 %v189
    %294 = vmatprep.subr.bf16.mxu0 %v194
    %295 = vmatpush1.bf16.msra.mxu0 %v193
    %296 = vmatprep.subr.bf16.mxu0 %v198
    %297 = vmatpush1.bf16.msra.mxu0 %v197
    %298 = vmatprep.subr.bf16.mxu0 %v202
    %299 = vmatpush1.bf16.msra.mxu0 %v201
    %300 = vmatprep.subr.bf16.mxu0 %v206
    %301 = vmatpush1.bf16.msra.mxu0 %v205
    %302 = vmatprep.subr.bf16.mxu0 %v210
    %303 = vmatpush1.bf16.msra.mxu0 %v209
    %304 = vmatprep.subr.bf16.mxu0 %v214
    %305 = vmatpush1.bf16.msra.mxu0 %v213
    %306 = vmatprep.subr.bf16.mxu0 %v218
    %307 = vmatpush1.bf16.msra.mxu0 %v217
    %308 = vmatprep.subr.bf16.mxu0 0
    %309 = vmatpush1.bf16.msra.mxu0 0
    %310 = vmatprep.subr.bf16.mxu0 0
    %311 = vmatpush1.bf16.msra.mxu0 0
    %312 = vmatprep.subr.bf16.mxu0 0
    %313 = vmatpush1.bf16.msra.mxu0 0
    %314 = vmatprep.subr.bf16.mxu0 0
    %315 = vmatpush1.bf16.msra.mxu0 0
    %316 = vmatprep.subr.bf16.mxu0 0
    %317 = vmatpush1.bf16.msra.mxu0 0
    %318 = vmatprep.subr.bf16.mxu0 0
    %319 = vmatpush1.bf16.msra.mxu0 0
    %320 = vmatprep.subr.bf16.mxu0 0
    %321 = vmatpush1.bf16.msra.mxu0 0
    %322 = vmatprep.subr.bf16.mxu0 0
    %323 = vmatpush1.bf16.msra.mxu0 0
    %324 = vmatprep.mubr.bf16.mxu0 0
    %325 = vmatmul.mubr.bf16.gmra.mrb[0].mxu0 %v58
    %v326 = vpop.f32.mrb[0].mxu0
    %v327 = vadd.f32 0.0, %v326
    %v328 = vpop.f32.mrb[0].mxu0
    %v329 = vadd.f32 0.0, %v328
    %v330 = vpop.f32.mrb[0].mxu0
    %v331 = vpop.f32.mrb[0].mxu0
    %332 = vdwg.mxu0
    %v333 = vmax.f32 %v286, 0.0
    %v334 = vmax.f32 %v288, 0.0
    %v335 = vmax.f32 %v327, 0.0
    %v336 = vmax.f32 %v329, 0.0
    %v337 = vpack.c.bf16 %v333, %v333
    %v338 = vpack.c.bf16 %v334, %v334
    %v339 = vpack.c.bf16 %v335, %v335
    %v340 = vpack.c.bf16 %v336, %v336
    %v341 = vld [vmem:[#allocation5] sm:$0xff]
    %v342 = vld [vmem:[#allocation5 + $0x8] sm:$0xf]
    %v343 = vld [vmem:[#allocation5 + $0xc] sm:$0xff]
    %v344 = vld [vmem:[#allocation5 + $0x14] sm:$0xf]
    %v345 = vld [vmem:[#allocation5 + $0x18] sm:$0xff]
    %v346 = vld [vmem:[#allocation5 + $0x20] sm:$0xf]
    %v347 = vld [vmem:[#allocation5 + $0x24] sm:$0xff]
    %v348 = vld [vmem:[#allocation5 + $0x2c] sm:$0xf]
    %v349 = vld [vmem:[#allocation5 + $0x30] sm:$0xff]
    %v350 = vld [vmem:[#allocation5 + $0x38] sm:$0xf]
    %v351 = vld [vmem:[#allocation5 + $0x3c] sm:$0xff]
    %v352 = vld [vmem:[#allocation5 + $0x44] sm:$0xf]
    %v353 = vld [vmem:[#allocation5 + $0x48] sm:$0xff]
    %v354 = vld [vmem:[#allocation5 + $0x50] sm:$0xf]
    %v355 = vld [vmem:[#allocation5 + $0x54] sm:$0xff]
    %v356 = vld [vmem:[#allocation5 + $0x5c] sm:$0xf]
    %v357 = vld [vmem:[#allocation5 + $0x60] sm:$0xff]
    %v358 = vld [vmem:[#allocation5 + $0x68] sm:$0xf]
    %v359 = vld [vmem:[#allocation5 + $0x6c] sm:$0xff]
    %v360 = vld [vmem:[#allocation5 + $0x74] sm:$0xf]
    %v361 = vld [vmem:[#allocation5 + $0x78] sm:$0xff]
    %v362 = vld [vmem:[#allocation5 + $0x80] sm:$0xf]
    %v363 = vld [vmem:[#allocation5 + $0x84] sm:$0xff]
    %v364 = vld [vmem:[#allocation5 + $0x8c] sm:$0xf]
    %v365 = vld [vmem:[#allocation5 + $0x90] sm:$0xff]
    %v366 = vld [vmem:[#allocation5 + $0x98] sm:$0xf]
    %v367 = vld [vmem:[#allocation5 + $0x9c] sm:$0xff]
    %v368 = vld [vmem:[#allocation5 + $0xa4] sm:$0xf]
    %v369 = vld [vmem:[#allocation5 + $0xa8] sm:$0xff]
    %v370 = vld [vmem:[#allocation5 + $0xb0] sm:$0xf]
    %v371 = vld [vmem:[#allocation5 + $0xb4] sm:$0xff]
    %v372 = vld [vmem:[#allocation5 + $0xbc] sm:$0xf]
    %v373 = vld [vmem:[#allocation5 + $0xc0] sm:$0xff]
    %v374 = vld [vmem:[#allocation5 + $0xc8] sm:$0xf]
    %v375 = vld [vmem:[#allocation5 + $0xcc] sm:$0xff]
    %v376 = vld [vmem:[#allocation5 + $0xd4] sm:$0xf]
    %v377 = vld [vmem:[#allocation5 + $0xd8] sm:$0xff]
    %v378 = vld [vmem:[#allocation5 + $0xe0] sm:$0xf]
    %v379 = vld [vmem:[#allocation5 + $0xe4] sm:$0xff]
    %v380 = vld [vmem:[#allocation5 + $0xec] sm:$0xf]
    %v381 = vld [vmem:[#allocation5 + $0xf0] sm:$0xff]
    %v382 = vld [vmem:[#allocation5 + $0xf8] sm:$0xf]
    %v383 = vld [vmem:[#allocation5 + $0xfc] sm:$0xff]
    %v384 = vld [vmem:[#allocation5 + $0x104] sm:$0xf]
    %v385 = vld [vmem:[#allocation5 + $0x108] sm:$0xff]
    %v386 = vld [vmem:[#allocation5 + $0x110] sm:$0xf]
    %v387 = vld [vmem:[#allocation5 + $0x114] sm:$0xff]
    %v388 = vld [vmem:[#allocation5 + $0x11c] sm:$0xf]
    %v389 = vld [vmem:[#allocation5 + $0x120] sm:$0xff]
    %v390 = vld [vmem:[#allocation5 + $0x128] sm:$0xf]
    %v391 = vld [vmem:[#allocation5 + $0x12c] sm:$0xff]
    %v392 = vld [vmem:[#allocation5 + $0x134] sm:$0xf]
    %v393 = vld [vmem:[#allocation5 + $0x138] sm:$0xff]
    %v394 = vld [vmem:[#allocation5 + $0x140] sm:$0xf]
    %v395 = vld [vmem:[#allocation5 + $0x144] sm:$0xff]
    %v396 = vld [vmem:[#allocation5 + $0x14c] sm:$0xf]
    %v397 = vld [vmem:[#allocation5 + $0x150] sm:$0xff]
    %v398 = vld [vmem:[#allocation5 + $0x158] sm:$0xf]
    %v399 = vld [vmem:[#allocation5 + $0x15c] sm:$0xff]
    %v400 = vld [vmem:[#allocation5 + $0x164] sm:$0xf]
    %v401 = vld [vmem:[#allocation5 + $0x168] sm:$0xff]
    %v402 = vld [vmem:[#allocation5 + $0x170] sm:$0xf]
    %v403 = vld [vmem:[#allocation5 + $0x174] sm:$0xff]
    %v404 = vld [vmem:[#allocation5 + $0x17c] sm:$0xf]
    %v405 = vld [vmem:[#allocation5 + $0x180] sm:$0xff]
    %v406 = vld [vmem:[#allocation5 + $0x188] sm:$0xf]
    %v407 = vld [vmem:[#allocation5 + $0x18c] sm:$0xff]
    %v408 = vld [vmem:[#allocation5 + $0x194] sm:$0xf]
    %v409 = vld [vmem:[#allocation5 + $0x198] sm:$0xff]
    %v410 = vld [vmem:[#allocation5 + $0x1a0] sm:$0xf]
    %v411 = vld [vmem:[#allocation5 + $0x1a4] sm:$0xff]
    %v412 = vld [vmem:[#allocation5 + $0x1ac] sm:$0xf]
    %v413 = vld [vmem:[#allocation5 + $0x1b0] sm:$0xff]
    %v414 = vld [vmem:[#allocation5 + $0x1b8] sm:$0xf]
    %v415 = vld [vmem:[#allocation5 + $0x1bc] sm:$0xff]
    %v416 = vld [vmem:[#allocation5 + $0x1c4] sm:$0xf]
    %v417 = vld [vmem:[#allocation5 + $0x1c8] sm:$0xff]
    %v418 = vld [vmem:[#allocation5 + $0x1d0] sm:$0xf]
    %v419 = vld [vmem:[#allocation5 + $0x1d4] sm:$0xff]
    %v420 = vld [vmem:[#allocation5 + $0x1dc] sm:$0xf]
    %v421 = vld [vmem:[#allocation5 + $0x1e0] sm:$0xff]
    %v422 = vld [vmem:[#allocation5 + $0x1e8] sm:$0xf]
    %v423 = vld [vmem:[#allocation5 + $0x1ec] sm:$0xff]
    %v424 = vld [vmem:[#allocation5 + $0x1f4] sm:$0xf]
    %v425 = vld [vmem:[#allocation5 + $0x1f8] sm:$0xff]
    %v426 = vld [vmem:[#allocation5 + $0x200] sm:$0xf]
    %v427 = vld [vmem:[#allocation5 + $0x204] sm:$0xff]
    %v428 = vld [vmem:[#allocation5 + $0x20c] sm:$0xf]
    %v429 = vld [vmem:[#allocation5 + $0x210] sm:$0xff]
    %v430 = vld [vmem:[#allocation5 + $0x218] sm:$0xf]
    %v431 = vld [vmem:[#allocation5 + $0x21c] sm:$0xff]
    %v432 = vld [vmem:[#allocation5 + $0x224] sm:$0xf]
    %v433 = vld [vmem:[#allocation5 + $0x228] sm:$0xff]
    %v434 = vld [vmem:[#allocation5 + $0x230] sm:$0xf]
    %v435 = vld [vmem:[#allocation5 + $0x234] sm:$0xff]
    %v436 = vld [vmem:[#allocation5 + $0x23c] sm:$0xf]
    %v437 = vld [vmem:[#allocation5 + $0x240] sm:$0xff]
    %v438 = vld [vmem:[#allocation5 + $0x248] sm:$0xf]
    %v439 = vld [vmem:[#allocation5 + $0x24c] sm:$0xff]
    %v440 = vld [vmem:[#allocation5 + $0x254] sm:$0xf]
    %v441 = vld [vmem:[#allocation5 + $0x258] sm:$0xff]
    %v442 = vld [vmem:[#allocation5 + $0x260] sm:$0xf]
    %v443 = vld [vmem:[#allocation5 + $0x264] sm:$0xff]
    %v444 = vld [vmem:[#allocation5 + $0x26c] sm:$0xf]
    %v445 = vld [vmem:[#allocation5 + $0x270] sm:$0xff]
    %v446 = vld [vmem:[#allocation5 + $0x278] sm:$0xf]
    %v447 = vld [vmem:[#allocation5 + $0x27c] sm:$0xff]
    %v448 = vld [vmem:[#allocation5 + $0x284] sm:$0xf]
    %v449 = vld [vmem:[#allocation5 + $0x288] sm:$0xff]
    %v450 = vld [vmem:[#allocation5 + $0x290] sm:$0xf]
    %v451 = vld [vmem:[#allocation5 + $0x294] sm:$0xff]
    %v452 = vld [vmem:[#allocation5 + $0x29c] sm:$0xf]
    %v453 = vld [vmem:[#allocation5 + $0x2a0] sm:$0xff]
    %v454 = vld [vmem:[#allocation5 + $0x2a8] sm:$0xf]
    %v455 = vld [vmem:[#allocation5 + $0x2ac] sm:$0xff]
    %v456 = vld [vmem:[#allocation5 + $0x2b4] sm:$0xf]
    %v457 = vld [vmem:[#allocation5 + $0x2b8] sm:$0xff]
    %v458 = vld [vmem:[#allocation5 + $0x2c0] sm:$0xf]
    %v459 = vld [vmem:[#allocation5 + $0x2c4] sm:$0xff]
    %v460 = vld [vmem:[#allocation5 + $0x2cc] sm:$0xf]
    %v461 = vld [vmem:[#allocation5 + $0x2d0] sm:$0xff]
    %v462 = vld [vmem:[#allocation5 + $0x2d8] sm:$0xf]
    %v463 = vld [vmem:[#allocation5 + $0x2dc] sm:$0xff]
    %v464 = vld [vmem:[#allocation5 + $0x2e4] sm:$0xf]
    %v465 = vld [vmem:[#allocation5 + $0x2e8] sm:$0xff]
    %v466 = vld [vmem:[#allocation5 + $0x2f0] sm:$0xf]
    %v467 = vld [vmem:[#allocation5 + $0x2f4] sm:$0xff]
    %v468 = vld [vmem:[#allocation5 + $0x2fc] sm:$0xf]
    %v469 = vld [vmem:[%s4] sm:$0x7]
    %v471 = vlaneseq
    %v472 = vshrl.u32 %v471, 7
    %v473 = vsub.s32 0, %v472
    %v474 = vrot.slane %v469, %v473
    %v475 = vlaneseq
    %v476 = vshrl.u32 %v475, 7
    %v477 = vsub.s32 1, %v476
    %v478 = vrot.slane %v469, %v477
    %v479 = vlaneseq
    %v480 = vshrl.u32 %v479, 7
    %v481 = vsub.s32 2, %v480
    %v482 = vrot.slane %v469, %v481
    %v614 = vunpack.c.l.b16 %v341
    %v615 = vunpack.c.h.b16 %v341
    %v616 = vunpack.c.l.b16 %v342
    %v617 = vunpack.c.l.b16 %v343
    %v618 = vunpack.c.h.b16 %v343
    %v619 = vunpack.c.l.b16 %v344
    %v620 = vunpack.c.l.b16 %v345
    %v621 = vunpack.c.h.b16 %v345
    %v622 = vunpack.c.l.b16 %v346
    %v623 = vunpack.c.l.b16 %v347
    %v624 = vunpack.c.h.b16 %v347
    %v625 = vunpack.c.l.b16 %v348
    %v626 = vunpack.c.l.b16 %v349
    %v627 = vunpack.c.h.b16 %v349
    %v628 = vunpack.c.l.b16 %v350
    %v629 = vunpack.c.l.b16 %v351
    %v630 = vunpack.c.h.b16 %v351
    %v631 = vunpack.c.l.b16 %v352
    %v632 = vunpack.c.l.b16 %v353
    %v633 = vunpack.c.h.b16 %v353
    %v634 = vunpack.c.l.b16 %v354
    %v635 = vunpack.c.l.b16 %v355
    %v636 = vunpack.c.h.b16 %v355
    %v637 = vunpack.c.l.b16 %v356
    %v638 = vunpack.c.l.b16 %v357
    %v639 = vunpack.c.h.b16 %v357
    %v640 = vunpack.c.l.b16 %v358
    %v641 = vunpack.c.l.b16 %v359
    %v642 = vunpack.c.h.b16 %v359
    %v643 = vunpack.c.l.b16 %v360
    %v644 = vunpack.c.l.b16 %v361
    %v645 = vunpack.c.h.b16 %v361
    %v646 = vunpack.c.l.b16 %v362
    %v647 = vunpack.c.l.b16 %v363
    %v648 = vunpack.c.h.b16 %v363
    %v649 = vunpack.c.l.b16 %v364
    %v650 = vunpack.c.l.b16 %v365
    %v651 = vunpack.c.h.b16 %v365
    %v652 = vunpack.c.l.b16 %v366
    %v653 = vunpack.c.l.b16 %v367
    %v654 = vunpack.c.h.b16 %v367
    %v655 = vunpack.c.l.b16 %v368
    %v656 = vunpack.c.l.b16 %v369
    %v657 = vunpack.c.h.b16 %v369
    %v658 = vunpack.c.l.b16 %v370
    %v659 = vunpack.c.l.b16 %v371
    %v660 = vunpack.c.h.b16 %v371
    %v661 = vunpack.c.l.b16 %v372
    %v662 = vunpack.c.l.b16 %v373
    %v663 = vunpack.c.h.b16 %v373
    %v664 = vunpack.c.l.b16 %v374
    %v665 = vunpack.c.l.b16 %v375
    %v666 = vunpack.c.h.b16 %v375
    %v667 = vunpack.c.l.b16 %v376
    %v668 = vunpack.c.l.b16 %v377
    %v669 = vunpack.c.h.b16 %v377
    %v670 = vunpack.c.l.b16 %v378
    %v671 = vunpack.c.l.b16 %v379
    %v672 = vunpack.c.h.b16 %v379
    %v673 = vunpack.c.l.b16 %v380
    %v674 = vunpack.c.l.b16 %v381
    %v675 = vunpack.c.h.b16 %v381
    %v676 = vunpack.c.l.b16 %v382
    %v677 = vunpack.c.l.b16 %v383
    %v678 = vunpack.c.h.b16 %v383
    %v679 = vunpack.c.l.b16 %v384
    %v680 = vunpack.c.l.b16 %v385
    %v681 = vunpack.c.h.b16 %v385
    %v682 = vunpack.c.l.b16 %v386
    %v683 = vunpack.c.l.b16 %v387
    %v684 = vunpack.c.h.b16 %v387
    %v685 = vunpack.c.l.b16 %v388
    %v686 = vunpack.c.l.b16 %v389
    %v687 = vunpack.c.h.b16 %v389
    %v688 = vunpack.c.l.b16 %v390
    %v689 = vunpack.c.l.b16 %v391
    %v690 = vunpack.c.h.b16 %v391
    %v691 = vunpack.c.l.b16 %v392
    %v692 = vunpack.c.l.b16 %v393
    %v693 = vunpack.c.h.b16 %v393
    %v694 = vunpack.c.l.b16 %v394
    %v695 = vunpack.c.l.b16 %v395
    %v696 = vunpack.c.h.b16 %v395
    %v697 = vunpack.c.l.b16 %v396
    %v698 = vunpack.c.l.b16 %v397
    %v699 = vunpack.c.h.b16 %v397
    %v700 = vunpack.c.l.b16 %v398
    %v701 = vunpack.c.l.b16 %v399
    %v702 = vunpack.c.h.b16 %v399
    %v703 = vunpack.c.l.b16 %v400
    %v704 = vunpack.c.l.b16 %v401
    %v705 = vunpack.c.h.b16 %v401
    %v706 = vunpack.c.l.b16 %v402
    %v707 = vunpack.c.l.b16 %v403
    %v708 = vunpack.c.h.b16 %v403
    %v709 = vunpack.c.l.b16 %v404
    %v710 = vunpack.c.l.b16 %v405
    %v711 = vunpack.c.h.b16 %v405
    %v712 = vunpack.c.l.b16 %v406
    %v713 = vunpack.c.l.b16 %v407
    %v714 = vunpack.c.h.b16 %v407
    %v715 = vunpack.c.l.b16 %v408
    %v716 = vunpack.c.l.b16 %v409
    %v717 = vunpack.c.h.b16 %v409
    %v718 = vunpack.c.l.b16 %v410
    %v719 = vunpack.c.l.b16 %v411
    %v720 = vunpack.c.h.b16 %v411
    %v721 = vunpack.c.l.b16 %v412
    %v722 = vunpack.c.l.b16 %v413
    %v723 = vunpack.c.h.b16 %v413
    %v724 = vunpack.c.l.b16 %v414
    %v725 = vunpack.c.l.b16 %v415
    %v726 = vunpack.c.h.b16 %v415
    %v727 = vunpack.c.l.b16 %v416
    %v728 = vunpack.c.l.b16 %v417
    %v729 = vunpack.c.h.b16 %v417
    %v730 = vunpack.c.l.b16 %v418
    %v731 = vunpack.c.l.b16 %v419
    %v732 = vunpack.c.h.b16 %v419
    %v733 = vunpack.c.l.b16 %v420
    %v734 = vunpack.c.l.b16 %v421
    %v735 = vunpack.c.h.b16 %v421
    %v736 = vunpack.c.l.b16 %v422
    %v737 = vunpack.c.l.b16 %v423
    %v738 = vunpack.c.h.b16 %v423
    %v739 = vunpack.c.l.b16 %v424
    %v740 = vunpack.c.l.b16 %v425
    %v741 = vunpack.c.h.b16 %v425
    %v742 = vunpack.c.l.b16 %v426
    %v743 = vunpack.c.l.b16 %v427
    %v744 = vunpack.c.h.b16 %v427
    %v745 = vunpack.c.l.b16 %v428
    %v746 = vunpack.c.l.b16 %v429
    %v747 = vunpack.c.h.b16 %v429
    %v748 = vunpack.c.l.b16 %v430
    %v749 = vunpack.c.l.b16 %v431
    %v750 = vunpack.c.h.b16 %v431
    %v751 = vunpack.c.l.b16 %v432
    %v752 = vunpack.c.l.b16 %v433
    %v753 = vunpack.c.h.b16 %v433
    %v754 = vunpack.c.l.b16 %v434
    %v755 = vunpack.c.l.b16 %v435
    %v756 = vunpack.c.h.b16 %v435
    %v757 = vunpack.c.l.b16 %v436
    %v758 = vunpack.c.l.b16 %v437
    %v759 = vunpack.c.h.b16 %v437
    %v760 = vunpack.c.l.b16 %v438
    %v761 = vunpack.c.l.b16 %v439
    %v762 = vunpack.c.h.b16 %v439
    %v763 = vunpack.c.l.b16 %v440
    %v764 = vunpack.c.l.b16 %v441
    %v765 = vunpack.c.h.b16 %v441
    %v766 = vunpack.c.l.b16 %v442
    %v767 = vunpack.c.l.b16 %v443
    %v768 = vunpack.c.h.b16 %v443
    %v769 = vunpack.c.l.b16 %v444
    %v770 = vunpack.c.l.b16 %v445
    %v771 = vunpack.c.h.b16 %v445
    %v772 = vunpack.c.l.b16 %v446
    %v773 = vunpack.c.l.b16 %v447
    %v774 = vunpack.c.h.b16 %v447
    %v775 = vunpack.c.l.b16 %v448
    %v776 = vunpack.c.l.b16 %v449
    %v777 = vunpack.c.h.b16 %v449
    %v778 = vunpack.c.l.b16 %v450
    %v779 = vunpack.c.l.b16 %v451
    %v780 = vunpack.c.h.b16 %v451
    %v781 = vunpack.c.l.b16 %v452
    %v782 = vunpack.c.l.b16 %v453
    %v783 = vunpack.c.h.b16 %v453
    %v784 = vunpack.c.l.b16 %v454
    %v785 = vunpack.c.l.b16 %v455
    %v786 = vunpack.c.h.b16 %v455
    %v787 = vunpack.c.l.b16 %v456
    %v788 = vunpack.c.l.b16 %v457
    %v789 = vunpack.c.h.b16 %v457
    %v790 = vunpack.c.l.b16 %v458
    %v791 = vunpack.c.l.b16 %v459
    %v792 = vunpack.c.h.b16 %v459
    %v793 = vunpack.c.l.b16 %v460
    %v794 = vunpack.c.l.b16 %v461
    %v795 = vunpack.c.h.b16 %v461
    %v796 = vunpack.c.l.b16 %v462
    %v797 = vunpack.c.l.b16 %v463
    %v798 = vunpack.c.h.b16 %v463
    %v799 = vunpack.c.l.b16 %v464
    %v800 = vunpack.c.l.b16 %v465
    %v801 = vunpack.c.h.b16 %v465
    %v802 = vunpack.c.l.b16 %v466
    %v803 = vunpack.c.l.b16 %v467
    %v804 = vunpack.c.h.b16 %v467
    %v805 = vunpack.c.l.b16 %v468
    %v806 = vpack.c.b16 %v617, %v614
    %v807 = vpack.c.b16 %v618, %v615
    %v808 = vpack.c.b16 %v619, %v616
    %v809 = vpack.c.b16 %v623, %v620
    %v810 = vpack.c.b16 %v624, %v621
    %v811 = vpack.c.b16 %v625, %v622
    %v812 = vpack.c.b16 %v629, %v626
    %v813 = vpack.c.b16 %v630, %v627
    %v814 = vpack.c.b16 %v631, %v628
    %v815 = vpack.c.b16 %v635, %v632
    %v816 = vpack.c.b16 %v636, %v633
    %v817 = vpack.c.b16 %v637, %v634
    %v818 = vpack.c.b16 %v641, %v638
    %v819 = vpack.c.b16 %v642, %v639
    %v820 = vpack.c.b16 %v643, %v640
    %v821 = vpack.c.b16 %v647, %v644
    %v822 = vpack.c.b16 %v648, %v645
    %v823 = vpack.c.b16 %v649, %v646
    %v824 = vpack.c.b16 %v653, %v650
    %v825 = vpack.c.b16 %v654, %v651
    %v826 = vpack.c.b16 %v655, %v652
    %v827 = vpack.c.b16 %v659, %v656
    %v828 = vpack.c.b16 %v660, %v657
    %v829 = vpack.c.b16 %v661, %v658
    %v830 = vpack.c.b16 %v665, %v662
    %v831 = vpack.c.b16 %v666, %v663
    %v832 = vpack.c.b16 %v667, %v664
    %v833 = vpack.c.b16 %v671, %v668
    %v834 = vpack.c.b16 %v672, %v669
    %v835 = vpack.c.b16 %v673, %v670
    %v836 = vpack.c.b16 %v677, %v674
    %v837 = vpack.c.b16 %v678, %v675
    %v838 = vpack.c.b16 %v679, %v676
    %v839 = vpack.c.b16 %v683, %v680
    %v840 = vpack.c.b16 %v684, %v681
    %v841 = vpack.c.b16 %v685, %v682
    %v842 = vpack.c.b16 %v689, %v686
    %v843 = vpack.c.b16 %v690, %v687
    %v844 = vpack.c.b16 %v691, %v688
    %v845 = vpack.c.b16 %v695, %v692
    %v846 = vpack.c.b16 %v696, %v693
    %v847 = vpack.c.b16 %v697, %v694
    %v848 = vpack.c.b16 %v701, %v698
    %v849 = vpack.c.b16 %v702, %v699
    %v850 = vpack.c.b16 %v703, %v700
    %v851 = vpack.c.b16 %v707, %v704
    %v852 = vpack.c.b16 %v708, %v705
    %v853 = vpack.c.b16 %v709, %v706
    %v854 = vpack.c.b16 %v713, %v710
    %v855 = vpack.c.b16 %v714, %v711
    %v856 = vpack.c.b16 %v715, %v712
    %v857 = vpack.c.b16 %v719, %v716
    %v858 = vpack.c.b16 %v720, %v717
    %v859 = vpack.c.b16 %v721, %v718
    %v860 = vpack.c.b16 %v725, %v722
    %v861 = vpack.c.b16 %v726, %v723
    %v862 = vpack.c.b16 %v727, %v724
    %v863 = vpack.c.b16 %v731, %v728
    %v864 = vpack.c.b16 %v732, %v729
    %v865 = vpack.c.b16 %v733, %v730
    %v866 = vpack.c.b16 %v737, %v734
    %v867 = vpack.c.b16 %v738, %v735
    %v868 = vpack.c.b16 %v739, %v736
    %v869 = vpack.c.b16 %v743, %v740
    %v870 = vpack.c.b16 %v744, %v741
    %v871 = vpack.c.b16 %v745, %v742
    %v872 = vpack.c.b16 %v749, %v746
    %v873 = vpack.c.b16 %v750, %v747
    %v874 = vpack.c.b16 %v751, %v748
    %v875 = vpack.c.b16 %v755, %v752
    %v876 = vpack.c.b16 %v756, %v753
    %v877 = vpack.c.b16 %v757, %v754
    %v878 = vpack.c.b16 %v761, %v758
    %v879 = vpack.c.b16 %v762, %v759
    %v880 = vpack.c.b16 %v763, %v760
    %v881 = vpack.c.b16 %v767, %v764
    %v882 = vpack.c.b16 %v768, %v765
    %v883 = vpack.c.b16 %v769, %v766
    %v884 = vpack.c.b16 %v773, %v770
    %v885 = vpack.c.b16 %v774, %v771
    %v886 = vpack.c.b16 %v775, %v772
    %v887 = vpack.c.b16 %v779, %v776
    %v888 = vpack.c.b16 %v780, %v777
    %v889 = vpack.c.b16 %v781, %v778
    %v890 = vpack.c.b16 %v785, %v782
    %v891 = vpack.c.b16 %v786, %v783
    %v892 = vpack.c.b16 %v787, %v784
    %v893 = vpack.c.b16 %v791, %v788
    %v894 = vpack.c.b16 %v792, %v789
    %v895 = vpack.c.b16 %v793, %v790
    %v896 = vpack.c.b16 %v797, %v794
    %v897 = vpack.c.b16 %v798, %v795
    %v898 = vpack.c.b16 %v799, %v796
    %v899 = vpack.c.b16 %v803, %v800
    %v900 = vpack.c.b16 %v804, %v801
    %v901 = vpack.c.b16 %v805, %v802
    %998 = vmatprep.subr.bf16.mxu0 %v807
    %999 = vmatpush1.bf16.msra.mxu0 %v806
    %1000 = vmatprep.subr.bf16.mxu0 %v810
    %1001 = vmatpush1.bf16.msra.mxu0 %v809
    %1002 = vmatprep.subr.bf16.mxu0 %v813
    %1003 = vmatpush1.bf16.msra.mxu0 %v812
    %1004 = vmatprep.subr.bf16.mxu0 %v816
    %1005 = vmatpush1.bf16.msra.mxu0 %v815
    %1006 = vmatprep.subr.bf16.mxu0 %v819
    %1007 = vmatpush1.bf16.msra.mxu0 %v818
    %1008 = vmatprep.subr.bf16.mxu0 %v822
    %1009 = vmatpush1.bf16.msra.mxu0 %v821
    %1010 = vmatprep.subr.bf16.mxu0 %v825
    %1011 = vmatpush1.bf16.msra.mxu0 %v824
    %1012 = vmatprep.subr.bf16.mxu0 %v828
    %1013 = vmatpush1.bf16.msra.mxu0 %v827
    %1014 = vmatprep.subr.bf16.mxu0 %v831
    %1015 = vmatpush1.bf16.msra.mxu0 %v830
    %1016 = vmatprep.subr.bf16.mxu0 %v834
    %1017 = vmatpush1.bf16.msra.mxu0 %v833
    %1018 = vmatprep.subr.bf16.mxu0 %v837
    %1019 = vmatpush1.bf16.msra.mxu0 %v836
    %1020 = vmatprep.subr.bf16.mxu0 %v840
    %1021 = vmatpush1.bf16.msra.mxu0 %v839
    %1022 = vmatprep.subr.bf16.mxu0 %v843
    %1023 = vmatpush1.bf16.msra.mxu0 %v842
    %1024 = vmatprep.subr.bf16.mxu0 %v846
    %1025 = vmatpush1.bf16.msra.mxu0 %v845
    %1026 = vmatprep.subr.bf16.mxu0 %v849
    %1027 = vmatpush1.bf16.msra.mxu0 %v848
    %1028 = vmatprep.subr.bf16.mxu0 %v852
    %1029 = vmatpush1.bf16.msra.mxu0 %v851
    %1030 = vmatprep.mubr.bf16.mxu0 %v338
    %1031 = vmatmul.mubr.bf16.gmra.mrb[0].mxu0 %v337
    %v1032 = vpop.f32.mrb[0].mxu0
    %v1033 = vadd.f32 %v474, %v1032
    %v1034 = vpop.f32.mrb[0].mxu0
    %v1035 = vadd.f32 %v478, %v1034
    %v1036 = vpop.f32.mrb[0].mxu0
    %v1037 = vpop.f32.mrb[0].mxu0
    %1038 = vdwg.mxu0
    %1039 = vmatprep.subr.bf16.mxu0 %v855
    %1040 = vmatpush1.bf16.msra.mxu0 %v854
    %1041 = vmatprep.subr.bf16.mxu0 %v858
    %1042 = vmatpush1.bf16.msra.mxu0 %v857
    %1043 = vmatprep.subr.bf16.mxu0 %v861
    %1044 = vmatpush1.bf16.msra.mxu0 %v860
    %1045 = vmatprep.subr.bf16.mxu0 %v864
    %1046 = vmatpush1.bf16.msra.mxu0 %v863
    %1047 = vmatprep.subr.bf16.mxu0 %v867
    %1048 = vmatpush1.bf16.msra.mxu0 %v866
    %1049 = vmatprep.subr.bf16.mxu0 %v870
    %1050 = vmatpush1.bf16.msra.mxu0 %v869
    %1051 = vmatprep.subr.bf16.mxu0 %v873
    %1052 = vmatpush1.bf16.msra.mxu0 %v872
    %1053 = vmatprep.subr.bf16.mxu0 %v876
    %1054 = vmatpush1.bf16.msra.mxu0 %v875
    %1055 = vmatprep.subr.bf16.mxu0 %v879
    %1056 = vmatpush1.bf16.msra.mxu0 %v878
    %1057 = vmatprep.subr.bf16.mxu0 %v882
    %1058 = vmatpush1.bf16.msra.mxu0 %v881
    %1059 = vmatprep.subr.bf16.mxu0 %v885
    %1060 = vmatpush1.bf16.msra.mxu0 %v884
    %1061 = vmatprep.subr.bf16.mxu0 %v888
    %1062 = vmatpush1.bf16.msra.mxu0 %v887
    %1063 = vmatprep.subr.bf16.mxu0 %v891
    %1064 = vmatpush1.bf16.msra.mxu0 %v890
    %1065 = vmatprep.subr.bf16.mxu0 %v894
    %1066 = vmatpush1.bf16.msra.mxu0 %v893
    %1067 = vmatprep.subr.bf16.mxu0 %v897
    %1068 = vmatpush1.bf16.msra.mxu0 %v896
    %1069 = vmatprep.subr.bf16.mxu0 %v900
    %1070 = vmatpush1.bf16.msra.mxu0 %v899
    %1071 = vmatprep.mubr.bf16.mxu0 %v340
    %1072 = vmatmul.mubr.bf16.gmra.mrb[0].mxu0 %v339
    %v1073 = vpop.f32.mrb[0].mxu0
    %v1074 = vadd.f32 %v1033, %v1073
    %v1075 = vpop.f32.mrb[0].mxu0
    %v1076 = vadd.f32 %v1035, %v1075
    %v1077 = vpop.f32.mrb[0].mxu0
    %v1078 = vpop.f32.mrb[0].mxu0
    %1079 = vdwg.mxu0
    %1080 = vmatprep.subr.bf16.mxu0 0
    %1081 = vmatpush1.bf16.msra.mxu0 %v808
    %1082 = vmatprep.subr.bf16.mxu0 0
    %1083 = vmatpush1.bf16.msra.mxu0 %v811
    %1084 = vmatprep.subr.bf16.mxu0 0
    %1085 = vmatpush1.bf16.msra.mxu0 %v814
    %1086 = vmatprep.subr.bf16.mxu0 0
    %1087 = vmatpush1.bf16.msra.mxu0 %v817
    %1088 = vmatprep.subr.bf16.mxu0 0
    %1089 = vmatpush1.bf16.msra.mxu0 %v820
    %1090 = vmatprep.subr.bf16.mxu0 0
    %1091 = vmatpush1.bf16.msra.mxu0 %v823
    %1092 = vmatprep.subr.bf16.mxu0 0
    %1093 = vmatpush1.bf16.msra.mxu0 %v826
    %1094 = vmatprep.subr.bf16.mxu0 0
    %1095 = vmatpush1.bf16.msra.mxu0 %v829
    %1096 = vmatprep.subr.bf16.mxu0 0
    %1097 = vmatpush1.bf16.msra.mxu0 %v832
    %1098 = vmatprep.subr.bf16.mxu0 0
    %1099 = vmatpush1.bf16.msra.mxu0 %v835
    %1100 = vmatprep.subr.bf16.mxu0 0
    %1101 = vmatpush1.bf16.msra.mxu0 %v838
    %1102 = vmatprep.subr.bf16.mxu0 0
    %1103 = vmatpush1.bf16.msra.mxu0 %v841
    %1104 = vmatprep.subr.bf16.mxu0 0
    %1105 = vmatpush1.bf16.msra.mxu0 %v844
    %1106 = vmatprep.subr.bf16.mxu0 0
    %1107 = vmatpush1.bf16.msra.mxu0 %v847
    %1108 = vmatprep.subr.bf16.mxu0 0
    %1109 = vmatpush1.bf16.msra.mxu0 %v850
    %1110 = vmatprep.subr.bf16.mxu0 0
    %1111 = vmatpush1.bf16.msra.mxu0 %v853
    %1112 = vmatprep.mubr.bf16.mxu0 %v338
    %1113 = vmatmul.mubr.bf16.gmra.mrb[0].mxu0 %v337
    %v1114 = vpop.f32.mrb[0].mxu0
    %v1115 = vadd.f32 %v482, %v1114
    %v1116 = vpop.f32.mrb[0].mxu0
    %v1117 = vpop.f32.mrb[0].mxu0
    %v1118 = vpop.f32.mrb[0].mxu0
    %1119 = vdwg.mxu0
    %1120 = vmatprep.subr.bf16.mxu0 0
    %1121 = vmatpush1.bf16.msra.mxu0 %v856
    %1122 = vmatprep.subr.bf16.mxu0 0
    %1123 = vmatpush1.bf16.msra.mxu0 %v859
    %1124 = vmatprep.subr.bf16.mxu0 0
    %1125 = vmatpush1.bf16.msra.mxu0 %v862
    %1126 = vmatprep.subr.bf16.mxu0 0
    %1127 = vmatpush1.bf16.msra.mxu0 %v865
    %1128 = vmatprep.subr.bf16.mxu0 0
    %1129 = vmatpush1.bf16.msra.mxu0 %v868
    %1130 = vmatprep.subr.bf16.mxu0 0
    %1131 = vmatpush1.bf16.msra.mxu0 %v871
    %1132 = vmatprep.subr.bf16.mxu0 0
    %1133 = vmatpush1.bf16.msra.mxu0 %v874
    %1134 = vmatprep.subr.bf16.mxu0 0
    %1135 = vmatpush1.bf16.msra.mxu0 %v877
    %1136 = vmatprep.subr.bf16.mxu0 0
    %1137 = vmatpush1.bf16.msra.mxu0 %v880
    %1138 = vmatprep.subr.bf16.mxu0 0
    %1139 = vmatpush1.bf16.msra.mxu0 %v883
    %1140 = vmatprep.subr.bf16.mxu0 0
    %1141 = vmatpush1.bf16.msra.mxu0 %v886
    %1142 = vmatprep.subr.bf16.mxu0 0
    %1143 = vmatpush1.bf16.msra.mxu0 %v889
    %1144 = vmatprep.subr.bf16.mxu0 0
    %1145 = vmatpush1.bf16.msra.mxu0 %v892
    %1146 = vmatprep.subr.bf16.mxu0 0
    %1147 = vmatpush1.bf16.msra.mxu0 %v895
    %1148 = vmatprep.subr.bf16.mxu0 0
    %1149 = vmatpush1.bf16.msra.mxu0 %v898
    %1150 = vmatprep.subr.bf16.mxu0 0
    %1151 = vmatpush1.bf16.msra.mxu0 %v901
    %1152 = vmatprep.mubr.bf16.mxu0 %v340
    %1153 = vmatmul.mubr.bf16.gmra.mrb[0].mxu0 %v339
    %v1154 = vpop.f32.mrb[0].mxu0
    %v1155 = vadd.f32 %v1115, %v1154
    %v1156 = vpop.f32.mrb[0].mxu0
    %v1157 = vpop.f32.mrb[0].mxu0
    %v1158 = vpop.f32.mrb[0].mxu0
    %1159 = vdwg.mxu0
    %v1160 = vmax.f32 %v1074, 0.0
    %v1161 = vmax.f32 %v1076, 0.0
    %v1162 = vmax.f32 %v1155, 0.0
    %v1163 = vpack.c.bf16 %v1160, %v1160
    %v1164 = vpack.c.bf16 %v1161, %v1161
    %v1165 = vpack.c.bf16 %v1162, %v1162
    %v1166 = vld [vmem:[%s5] sm:$0xf]
    %v1167 = vld [vmem:[%s5 + $0x4] sm:$0xf]
    %v1168 = vld [vmem:[%s5 + $0x8] sm:$0xf]
    %v1169 = vld [vmem:[%s5 + $0xc] sm:$0xf]
    %v1170 = vld [vmem:[%s5 + $0x10] sm:$0xf]
    %v1171 = vld [vmem:[%s5 + $0x14] sm:$0xf]
    %v1172 = vld [vmem:[%s5 + $0x18] sm:$0xf]
    %v1173 = vld [vmem:[%s5 + $0x1c] sm:$0xf]
    %v1174 = vld [vmem:[%s5 + $0x20] sm:$0xf]
    %v1175 = vld [vmem:[%s5 + $0x24] sm:$0xf]
    %v1176 = vld [vmem:[%s5 + $0x28] sm:$0xf]
    %v1177 = vld [vmem:[%s5 + $0x2c] sm:$0xf]
    %v1178 = vld [vmem:[%s5 + $0x30] sm:$0xf]
    %v1179 = vld [vmem:[%s5 + $0x34] sm:$0xf]
    %v1180 = vld [vmem:[%s5 + $0x38] sm:$0xf]
    %v1181 = vld [vmem:[%s5 + $0x3c] sm:$0xf]
    %v1182 = vld [vmem:[%s5 + $0x40] sm:$0xf]
    %v1183 = vld [vmem:[%s5 + $0x44] sm:$0xf]
    %v1184 = vld [vmem:[%s5 + $0x48] sm:$0xf]
    %v1185 = vld [vmem:[%s5 + $0x4c] sm:$0xf]
    %v1186 = vld [vmem:[%s5 + $0x50] sm:$0xf]
    %v1187 = vld [vmem:[%s5 + $0x54] sm:$0xf]
    %v1188 = vld [vmem:[%s5 + $0x58] sm:$0xf]
    %v1189 = vld [vmem:[%s5 + $0x5c] sm:$0xf]
    %v1190 = vld [vmem:[%s5 + $0x60] sm:$0xf]
    %v1191 = vld [vmem:[%s5 + $0x64] sm:$0xf]
    %v1192 = vld [vmem:[%s5 + $0x68] sm:$0xf]
    %v1193 = vld [vmem:[%s5 + $0x6c] sm:$0xf]
    %v1194 = vld [vmem:[%s5 + $0x70] sm:$0xf]
    %v1195 = vld [vmem:[%s5 + $0x74] sm:$0xf]
    %v1196 = vld [vmem:[%s5 + $0x78] sm:$0xf]
    %v1197 = vld [vmem:[%s5 + $0x7c] sm:$0xf]
    %v1198 = vld [vmem:[%s5 + $0x80] sm:$0xf]
    %v1199 = vld [vmem:[%s5 + $0x84] sm:$0xf]
    %v1200 = vld [vmem:[%s5 + $0x88] sm:$0xf]
    %v1201 = vld [vmem:[%s5 + $0x8c] sm:$0xf]
    %v1202 = vld [vmem:[%s5 + $0x90] sm:$0xf]
    %v1203 = vld [vmem:[%s5 + $0x94] sm:$0xf]
    %v1204 = vld [vmem:[%s5 + $0x98] sm:$0xf]
    %v1205 = vld [vmem:[%s5 + $0x9c] sm:$0xf]
    %v1206 = vld [vmem:[%s5 + $0xa0] sm:$0xf]
    %v1207 = vld [vmem:[%s5 + $0xa4] sm:$0xf]
    %v1208 = vld [vmem:[%s5 + $0xa8] sm:$0xf]
    %v1209 = vld [vmem:[%s5 + $0xac] sm:$0xf]
    %v1210 = vld [vmem:[%s5 + $0xb0] sm:$0xf]
    %v1211 = vld [vmem:[%s5 + $0xb4] sm:$0xf]
    %v1212 = vld [vmem:[%s5 + $0xb8] sm:$0xf]
    %v1213 = vld [vmem:[%s5 + $0xbc] sm:$0xf]
    %v1214 = vld [vmem:[%s6] sm:$0x1]
    %v1216 = vlaneseq
    %v1217 = vshrl.u32 %v1216, 7
    %v1218 = vsub.s32 0, %v1217
    %v1219 = vrot.slane %v1214, %v1218
    %v1269 = vunpack.c.l.b16 %v1166
    %v1270 = vunpack.c.l.b16 %v1167
    %v1271 = vunpack.c.l.b16 %v1168
    %v1272 = vunpack.c.l.b16 %v1169
    %v1273 = vunpack.c.l.b16 %v1170
    %v1274 = vunpack.c.l.b16 %v1171
    %v1275 = vunpack.c.l.b16 %v1172
    %v1276 = vunpack.c.l.b16 %v1173
    %v1277 = vunpack.c.l.b16 %v1174
    %v1278 = vunpack.c.l.b16 %v1175
    %v1279 = vunpack.c.l.b16 %v1176
    %v1280 = vunpack.c.l.b16 %v1177
    %v1281 = vunpack.c.l.b16 %v1178
    %v1282 = vunpack.c.l.b16 %v1179
    %v1283 = vunpack.c.l.b16 %v1180
    %v1284 = vunpack.c.l.b16 %v1181
    %v1285 = vunpack.c.l.b16 %v1182
    %v1286 = vunpack.c.l.b16 %v1183
    %v1287 = vunpack.c.l.b16 %v1184
    %v1288 = vunpack.c.l.b16 %v1185
    %v1289 = vunpack.c.l.b16 %v1186
    %v1290 = vunpack.c.l.b16 %v1187
    %v1291 = vunpack.c.l.b16 %v1188
    %v1292 = vunpack.c.l.b16 %v1189
    %v1293 = vunpack.c.l.b16 %v1190
    %v1294 = vunpack.c.l.b16 %v1191
    %v1295 = vunpack.c.l.b16 %v1192
    %v1296 = vunpack.c.l.b16 %v1193
    %v1297 = vunpack.c.l.b16 %v1194
    %v1298 = vunpack.c.l.b16 %v1195
    %v1299 = vunpack.c.l.b16 %v1196
    %v1300 = vunpack.c.l.b16 %v1197
    %v1301 = vunpack.c.l.b16 %v1198
    %v1302 = vunpack.c.l.b16 %v1199
    %v1303 = vunpack.c.l.b16 %v1200
    %v1304 = vunpack.c.l.b16 %v1201
    %v1305 = vunpack.c.l.b16 %v1202
    %v1306 = vunpack.c.l.b16 %v1203
    %v1307 = vunpack.c.l.b16 %v1204
    %v1308 = vunpack.c.l.b16 %v1205
    %v1309 = vunpack.c.l.b16 %v1206
    %v1310 = vunpack.c.l.b16 %v1207
    %v1311 = vunpack.c.l.b16 %v1208
    %v1312 = vunpack.c.l.b16 %v1209
    %v1313 = vunpack.c.l.b16 %v1210
    %v1314 = vunpack.c.l.b16 %v1211
    %v1315 = vunpack.c.l.b16 %v1212
    %v1316 = vunpack.c.l.b16 %v1213
    %v1317 = vpack.c.b16 %v1270, %v1269
    %v1318 = vpack.c.b16 %v1272, %v1271
    %v1319 = vpack.c.b16 %v1274, %v1273
    %v1320 = vpack.c.b16 %v1276, %v1275
    %v1321 = vpack.c.b16 %v1278, %v1277
    %v1322 = vpack.c.b16 %v1280, %v1279
    %v1323 = vpack.c.b16 %v1282, %v1281
    %v1324 = vpack.c.b16 %v1284, %v1283
    %v1325 = vpack.c.b16 %v1286, %v1285
    %v1326 = vpack.c.b16 %v1288, %v1287
    %v1327 = vpack.c.b16 %v1290, %v1289
    %v1328 = vpack.c.b16 %v1292, %v1291
    %v1329 = vpack.c.b16 %v1294, %v1293
    %v1330 = vpack.c.b16 %v1296, %v1295
    %v1331 = vpack.c.b16 %v1298, %v1297
    %v1332 = vpack.c.b16 %v1300, %v1299
    %v1333 = vpack.c.b16 %v1302, %v1301
    %v1334 = vpack.c.b16 %v1304, %v1303
    %v1335 = vpack.c.b16 %v1306, %v1305
    %v1336 = vpack.c.b16 %v1308, %v1307
    %v1337 = vpack.c.b16 %v1310, %v1309
    %v1338 = vpack.c.b16 %v1312, %v1311
    %v1339 = vpack.c.b16 %v1314, %v1313
    %v1340 = vpack.c.b16 %v1316, %v1315
    %1365 = vmatprep.subr.bf16.mxu0 0
    %1366 = vmatpush1.bf16.msra.mxu0 %v1317
    %1367 = vmatprep.subr.bf16.mxu0 0
    %1368 = vmatpush1.bf16.msra.mxu0 %v1318
    %1369 = vmatprep.subr.bf16.mxu0 0
    %1370 = vmatpush1.bf16.msra.mxu0 %v1319
    %1371 = vmatprep.subr.bf16.mxu0 0
    %1372 = vmatpush1.bf16.msra.mxu0 %v1320
    %1373 = vmatprep.subr.bf16.mxu0 0
    %1374 = vmatpush1.bf16.msra.mxu0 %v1321
    %1375 = vmatprep.subr.bf16.mxu0 0
    %1376 = vmatpush1.bf16.msra.mxu0 %v1322
    %1377 = vmatprep.subr.bf16.mxu0 0
    %1378 = vmatpush1.bf16.msra.mxu0 %v1323
    %1379 = vmatprep.subr.bf16.mxu0 0
    %1380 = vmatpush1.bf16.msra.mxu0 %v1324
    %1381 = vmatprep.subr.bf16.mxu0 0
    %1382 = vmatpush1.bf16.msra.mxu0 %v1325
    %1383 = vmatprep.subr.bf16.mxu0 0
    %1384 = vmatpush1.bf16.msra.mxu0 %v1326
    %1385 = vmatprep.subr.bf16.mxu0 0
    %1386 = vmatpush1.bf16.msra.mxu0 %v1327
    %1387 = vmatprep.subr.bf16.mxu0 0
    %1388 = vmatpush1.bf16.msra.mxu0 %v1328
    %1389 = vmatprep.subr.bf16.mxu0 0
    %1390 = vmatpush1.bf16.msra.mxu0 %v1329
    %1391 = vmatprep.subr.bf16.mxu0 0
    %1392 = vmatpush1.bf16.msra.mxu0 %v1330
    %1393 = vmatprep.subr.bf16.mxu0 0
    %1394 = vmatpush1.bf16.msra.mxu0 %v1331
    %1395 = vmatprep.subr.bf16.mxu0 0
    %1396 = vmatpush1.bf16.msra.mxu0 %v1332
    %1397 = vmatprep.mubr.bf16.mxu0 %v1164
    %1398 = vmatmul.mubr.bf16.gmra.mrb[0].mxu0 %v1163
    %v1399 = vpop.f32.mrb[0].mxu0
    %v1400 = vadd.f32 %v1219, %v1399
    %v1401 = vpop.f32.mrb[0].mxu0
    %v1402 = vpop.f32.mrb[0].mxu0
    %v1403 = vpop.f32.mrb[0].mxu0
    %1404 = vdwg.mxu0
    %1405 = vmatprep.subr.bf16.mxu0 0
    %1406 = vmatpush1.bf16.msra.mxu0 %v1333
    %1407 = vmatprep.subr.bf16.mxu0 0
    %1408 = vmatpush1.bf16.msra.mxu0 %v1334
    %1409 = vmatprep.subr.bf16.mxu0 0
    %1410 = vmatpush1.bf16.msra.mxu0 %v1335
    %1411 = vmatprep.subr.bf16.mxu0 0
    %1412 = vmatpush1.bf16.msra.mxu0 %v1336
    %1413 = vmatprep.subr.bf16.mxu0 0
    %1414 = vmatpush1.bf16.msra.mxu0 %v1337
    %1415 = vmatprep.subr.bf16.mxu0 0
    %1416 = vmatpush1.bf16.msra.mxu0 %v1338
    %1417 = vmatprep.subr.bf16.mxu0 0
    %1418 = vmatpush1.bf16.msra.mxu0 %v1339
    %1419 = vmatprep.subr.bf16.mxu0 0
    %1420 = vmatpush1.bf16.msra.mxu0 %v1340
    %1421 = vmatprep.subr.bf16.mxu0 0
    %1422 = vmatpush1.bf16.msra.mxu0 0
    %1423 = vmatprep.subr.bf16.mxu0 0
    %1424 = vmatpush1.bf16.msra.mxu0 0
    %1425 = vmatprep.subr.bf16.mxu0 0
    %1426 = vmatpush1.bf16.msra.mxu0 0
    %1427 = vmatprep.subr.bf16.mxu0 0
    %1428 = vmatpush1.bf16.msra.mxu0 0
    %1429 = vmatprep.subr.bf16.mxu0 0
    %1430 = vmatpush1.bf16.msra.mxu0 0
    %1431 = vmatprep.subr.bf16.mxu0 0
    %1432 = vmatpush1.bf16.msra.mxu0 0
    %1433 = vmatprep.subr.bf16.mxu0 0
    %1434 = vmatpush1.bf16.msra.mxu0 0
    %1435 = vmatprep.subr.bf16.mxu0 0
    %1436 = vmatpush1.bf16.msra.mxu0 0
    %1437 = vmatprep.mubr.bf16.mxu0 0
    %1438 = vmatmul.mubr.bf16.gmra.mrb[0].mxu0 %v1165
    %v1439 = vpop.f32.mrb[0].mxu0
    %v1440 = vadd.f32 %v1400, %v1439
    %v1441 = vpop.f32.mrb[0].mxu0
    %v1442 = vpop.f32.mrb[0].mxu0
    %v1443 = vpop.f32.mrb[0].mxu0
    %1444 = vdwg.mxu0
    %v1445 = vtanh.pop %v1440
    %v1446 = vmul.f32 %v1445, 0.05
    %v1447 = vadd.f32 %v1446, %v56
    %v1448 = vmax.f32 %v1447, -1.0
    %v1449 = vmin.f32 %v1448, 1.0
    %vm1450 = vcmask 48128
    %1451 = vst.msk [vmem:[#allocation7] sm:$0xff] %vm1450, %v1449
    // Predicated region
    $region38: #{tpu_custom_call.1} parent=1 // pred_check
      _
    $region39: #{tpu_custom_call.1} parent=1 // pred_check_branch
      %1453 = sbr.rel (0) target = $region41
    $region40: #{tpu_custom_call.1} parent=1 // pred_region
      %s1455 = ssub.s32 128, 128
      %1456 = vsyncadd [#allocation4], %s1455
      %s1458 = sshll.u32 [#allocation7], 4
      %s1459 = int_to_ptr.vmem [resolvable:$true] %s1458
      %1461 = dma.vmem_to_hbm [thread:$0]  %s1459, 128, %s7, [#allocation4]
    $region41: #{tpu_custom_call.1} parent=1 // pred_fallthru
      _
    // Predicated region
    $region42: #{tpu_custom_call.1} parent=1 // pred_check
      _
    $region43: #{tpu_custom_call.1} parent=1 // pred_check_branch
      %1463 = sbr.rel (0) target = $region45
    $region44: #{tpu_custom_call.1} parent=1 // pred_region
      %1464 = dma.done [#allocation4], 128
    $region45: #{tpu_custom_call.1} parent=1 // pred_fallthru
      _
    %1465 = vsyncpa [#allocation3], 1
    %1466 = vsyncpa [#allocation6], 1
    %1467 = vsyncpa [#allocation4], 1

</llo_original>
